<compile_context>
chip_gen: v7x
topology: tpu7x:2x2x1
jax: 0.10.0
libtpu: 0.0.40
codegen_flags: <defaults>
</compile_context>

<pallas_src>
import jax
import jax.numpy as jnp
from jax.experimental import pallas as pl
from jax.experimental.pallas import tpu as pltpu

OUT_LANES = 128  # lane-dense padded output width (real classes sliced off in wrapper)


def _round_up(n, m):
    return ((n + m - 1) // m) * m


def _mlp_softmax_kernel(x_ref, w1_ref, b1_ref, w2_ref, b2_ref, w3_ref, b3_ref, o_ref):
    # x / weights arrive in bf16 (halves HBM traffic, doubles MXU rate on v6e/v7x);
    # accumulation and all elementwise math stay f32 (v5e VPU/EUP have no bf16 path).
    x = x_ref[...]

    # fc1 + relu1
    h1 = jnp.dot(x, w1_ref[...], preferred_element_type=jnp.float32) + b1_ref[...]
    h1 = jnp.maximum(h1, 0.0)

    # fc2 + relu2
    h2 = jnp.dot(h1.astype(jnp.bfloat16), w2_ref[...],
                 preferred_element_type=jnp.float32) + b2_ref[...]
    h2 = jnp.maximum(h2, 0.0)

    # dropout: identity at inference time (p=0.3 only active in training)

    # fc3 (output padded to 128 lanes; padded lanes carry a -1e30 bias so they
    # vanish under softmax -> unmasked lane-dense stores)
    logits = jnp.dot(h2.astype(jnp.bfloat16), w3_ref[...],
                     preferred_element_type=jnp.float32) + b3_ref[...]

    # numerically stable softmax over the lane (class) axis
    m = jnp.max(logits, axis=-1, keepdims=True)
    e = jnp.exp(logits - m)
    s = jnp.sum(e, axis=-1, keepdims=True)
    o_ref[...] = e * pl.reciprocal(s, approx=False)


def iris_classifier_forward(x, params):
    """x: (B, input_size) float32. params: dict from init_params."""
    B, in_size = x.shape
    out_size = params["out_size"]
    h1 = params["w1_t"].shape[1]
    h2 = params["w2_t"].shape[1]

    # Batch tiling: large tiles amortize the ~0.35us/step pipeline overhead while
    # streaming x HBM->VMEM; tiny demo batches only round up to a packing granule.
    TB = min(1024, _round_up(B, 16))
    B_pad = _round_up(B, TB)

    xb = x.astype(jnp.bfloat16)
    if B_pad != B:
        xb = jnp.pad(xb, ((0, B_pad - B), (0, 0)))

    out = pl.pallas_call(
        _mlp_softmax_kernel,
        out_shape=jax.ShapeDtypeStruct((B_pad, OUT_LANES), jnp.float32),
        grid=(B_pad // TB,),
        in_specs=[
            pl.BlockSpec((TB, in_size), lambda i: (i, 0)),    # x: streamed over batch
            pl.BlockSpec((in_size, h1), lambda i: (0, 0)),    # w1_t: VMEM-resident
            pl.BlockSpec((1, h1), lambda i: (0, 0)),          # b1
            pl.BlockSpec((h1, h2), lambda i: (0, 0)),         # w2_t
            pl.BlockSpec((1, h2), lambda i: (0, 0)),          # b2
            pl.BlockSpec((h2, OUT_LANES), lambda i: (0, 0)),  # w3_t (lane-padded)
            pl.BlockSpec((1, OUT_LANES), lambda i: (0, 0)),   # b3  (lane-padded)
        ],
        out_specs=pl.BlockSpec((TB, OUT_LANES), lambda i: (i, 0)),
        compiler_params=pltpu.CompilerParams(
            # batch axis is embarrassingly parallel -> v7x shards it over 2 TCs;
            # harmless no-op on v5e/v6e.
            dimension_semantics=("parallel",),
        ),
    )(
        xb,
        params["w1_t"], params["b1"],
        params["w2_t"], params["b2"],
        params["w3_t"], params["b3"],
    )
    return out[:B, :out_size]


def init_params(key, input_size, hidden1, hidden2, output_size):
    """Deterministic synthetic parameters with nn.Linear-shaped weights (transposed)."""
    ks = jax.random.split(key, 6)
    scale = 0.1
    # stored as (in, out) = W.T relative to PyTorch's (out, in)
    w1 = scale * jax.random.normal(ks[0], (input_size, hidden1), jnp.float32)
    b1 = scale * jax.random.normal(ks[1], (1, hidden1), jnp.float32)
    w2 = scale * jax.random.normal(ks[2], (hidden1, hidden2), jnp.float32)
    b2 = scale * jax.random.normal(ks[3], (1, hidden2), jnp.float32)
    w3 = scale * jax.random.normal(ks[4], (hidden2, output_size), jnp.float32)
    b3 = scale * jax.random.normal(ks[5], (1, output_size), jnp.float32)

    # lane-dense fc3: pad the class axis to 128 lanes so output stores are unmasked;
    # padded logits get a -1e30 bias so softmax sends them to exactly 0.
    w3_p = jnp.zeros((hidden2, OUT_LANES), jnp.float32).at[:, :output_size].set(w3)
    b3_p = jnp.full((1, OUT_LANES), -1e30, jnp.float32).at[:, :output_size].set(b3)

    return {
        "out_size": output_size,
        "w1_t": w1.astype(jnp.bfloat16),
        "b1": b1,
        "w2_t": w2.astype(jnp.bfloat16),
        "b2": b2,
        "w3_t": w3_p.astype(jnp.bfloat16),
        "b3": b3_p,
        # f32 originals kept only for the pure-JAX reference check below
        "_f32": (w1, b1, w2, b2, w3, b3),
    }


if __name__ == "__main__":
    # Iris-like sizes: 4 features, two hidden layers, 3 classes.
    input_size, hidden1, hidden2, output_size = 4, 32, 16, 3
    batch = 8

    key = jax.random.PRNGKey(0)
    k_x, k_p = jax.random.split(key)
    x = jax.random.normal(k_x, (batch, input_size), jnp.float32)
    params = init_params(k_p, input_size, hidden1, hidden2, output_size)

    out = jax.block_until_ready(iris_classifier_forward(x, params))
    assert out.shape == (batch, output_size)

    # Reference with the same bf16-operand / f32-accumulate math (pure JAX).
    w1, b1, w2, b2, w3, b3 = params["_f32"]
    xb = x.astype(jnp.bfloat16)
    r1 = jnp.maximum(jnp.dot(xb, w1.astype(jnp.bfloat16),
                             preferred_element_type=jnp.float32) + b1, 0.0)
    r2 = jnp.maximum(jnp.dot(r1.astype(jnp.bfloat16), w2.astype(jnp.bfloat16),
                             preferred_element_type=jnp.float32) + b2, 0.0)
    logits = jnp.dot(r2.astype(jnp.bfloat16), w3.astype(jnp.bfloat16),
                     preferred_element_type=jnp.float32) + b3
    ref = jax.nn.softmax(logits, axis=1)
    assert jnp.allclose(out, ref, atol=1e-4), "mismatch vs bf16-math reference"

    # Full-f32 reference sanity check (bf16 operands stay within ~1e-2 after softmax).
    ref32 = jax.nn.softmax(
        jnp.maximum(jnp.maximum(x @ w1 + b1, 0.0) @ w2 + b2, 0.0) @ w3 + b3, axis=1)
    assert jnp.allclose(out, ref32, atol=2e-2), "mismatch vs f32 reference"
    assert jnp.allclose(jnp.sum(out, axis=1), 1.0, atol=1e-5)

    print("KERNEL_OK")
</pallas_src>

<mosaic_0001>
module attributes {stable_mosaic.version = 11 : i64} {
  func.func @_mlp_softmax_kernel(%arg0: i32, %arg1: memref<16x4xbf16, #tpu.memory_space<vmem>>, %arg2: memref<4x32xbf16, #tpu.memory_space<vmem>>, %arg3: memref<1x32xf32, #tpu.memory_space<vmem>>, %arg4: memref<32x16xbf16, #tpu.memory_space<vmem>>, %arg5: memref<1x16xf32, #tpu.memory_space<vmem>>, %arg6: memref<16x128xbf16, #tpu.memory_space<vmem>>, %arg7: memref<1x128xf32, #tpu.memory_space<vmem>>, %arg8: memref<16x128xf32, #tpu.memory_space<vmem>>) attributes {dimension_semantics = [#tpu.dimension_semantics<parallel>], iteration_bounds = array<i64: 1>, scalar_prefetch = 0 : i64, scratch_operands = 0 : i64, tpu.core_type = #tpu.core_type<tc>, window_params = [{transform_indices = @transform_0, window_bounds = array<i64: 16, 4>}, {pipeline_mode = #tpu.pipeline_mode<synchronous>, transform_indices = @transform_1, window_bounds = array<i64: 4, 32>}, {pipeline_mode = #tpu.pipeline_mode<synchronous>, transform_indices = @transform_2, window_bounds = array<i64: 1, 32>}, {pipeline_mode = #tpu.pipeline_mode<synchronous>, transform_indices = @transform_3, window_bounds = array<i64: 32, 16>}, {pipeline_mode = #tpu.pipeline_mode<synchronous>, transform_indices = @transform_4, window_bounds = array<i64: 1, 16>}, {pipeline_mode = #tpu.pipeline_mode<synchronous>, transform_indices = @transform_5, window_bounds = array<i64: 16, 128>}, {pipeline_mode = #tpu.pipeline_mode<synchronous>, transform_indices = @transform_6, window_bounds = array<i64: 1, 128>}, {transform_indices = @transform_7, window_bounds = array<i64: 16, 128>}]} {
    %c0 = arith.constant 0 : index
    %c0_0 = arith.constant 0 : index
    %0 = vector.load %arg1[%c0, %c0_0] : memref<16x4xbf16, #tpu.memory_space<vmem>>, vector<16x4xbf16>
    %c0_1 = arith.constant 0 : index
    %c0_2 = arith.constant 0 : index
    %1 = vector.load %arg2[%c0_1, %c0_2] : memref<4x32xbf16, #tpu.memory_space<vmem>>, vector<4x32xbf16>
    %cst = arith.constant dense<0.000000e+00> : vector<16x32xf32>
    %2 = tpu.matmul %0, %1, %cst {dimension_numbers = #tpu.dot_dimension_numbers<[1], [0], [0], [1], [0, 0, 1, 1], [], []>} : vector<16x4xbf16>, vector<4x32xbf16>, vector<16x32xf32> -> vector<16x32xf32>
    %c0_3 = arith.constant 0 : index
    %c0_4 = arith.constant 0 : index
    %3 = vector.load %arg3[%c0_3, %c0_4] : memref<1x32xf32, #tpu.memory_space<vmem>>, vector<1x32xf32>
    %4 = vector.broadcast %3 : vector<1x32xf32> to vector<16x32xf32>
    %5 = arith.addf %2, %4 : vector<16x32xf32>
    %cst_5 = arith.constant 0.000000e+00 : f32
    %6 = vector.broadcast %cst_5 : f32 to vector<16x32xf32>
    %7 = arith.maximumf %5, %6 : vector<16x32xf32>
    %8 = arith.truncf %7 : vector<16x32xf32> to vector<16x32xbf16>
    %c0_6 = arith.constant 0 : index
    %c0_7 = arith.constant 0 : index
    %9 = vector.load %arg4[%c0_6, %c0_7] : memref<32x16xbf16, #tpu.memory_space<vmem>>, vector<32x16xbf16>
    %cst_8 = arith.constant dense<0.000000e+00> : vector<16x16xf32>
    %10 = tpu.matmul %8, %9, %cst_8 {dimension_numbers = #tpu.dot_dimension_numbers<[1], [0], [0], [1], [0, 0, 1, 1], [], []>} : vector<16x32xbf16>, vector<32x16xbf16>, vector<16x16xf32> -> vector<16x16xf32>
    %c0_9 = arith.constant 0 : index
    %c0_10 = arith.constant 0 : index
    %11 = vector.load %arg5[%c0_9, %c0_10] : memref<1x16xf32, #tpu.memory_space<vmem>>, vector<1x16xf32>
    %12 = vector.broadcast %11 : vector<1x16xf32> to vector<16x16xf32>
    %13 = arith.addf %10, %12 : vector<16x16xf32>
    %cst_11 = arith.constant 0.000000e+00 : f32
    %14 = vector.broadcast %cst_11 : f32 to vector<16x16xf32>
    %15 = arith.maximumf %13, %14 : vector<16x16xf32>
    %16 = arith.truncf %15 : vector<16x16xf32> to vector<16x16xbf16>
    %c0_12 = arith.constant 0 : index
    %c0_13 = arith.constant 0 : index
    %17 = vector.load %arg6[%c0_12, %c0_13] : memref<16x128xbf16, #tpu.memory_space<vmem>>, vector<16x128xbf16>
    %cst_14 = arith.constant dense<0.000000e+00> : vector<16x128xf32>
    %18 = tpu.matmul %16, %17, %cst_14 {dimension_numbers = #tpu.dot_dimension_numbers<[1], [0], [0], [1], [0, 0, 1, 1], [], []>} : vector<16x16xbf16>, vector<16x128xbf16>, vector<16x128xf32> -> vector<16x128xf32>
    %c0_15 = arith.constant 0 : index
    %c0_16 = arith.constant 0 : index
    %19 = vector.load %arg7[%c0_15, %c0_16] : memref<1x128xf32, #tpu.memory_space<vmem>>, vector<1x128xf32>
    %20 = vector.broadcast %19 : vector<1x128xf32> to vector<16x128xf32>
    %21 = arith.addf %18, %20 : vector<16x128xf32>
    %cst_17 = arith.constant dense<0xFF800000> : vector<16xf32>
    %22 = vector.multi_reduction <maximumf>, %21, %cst_17 [1] : vector<16x128xf32> to vector<16xf32>
    %23 = vector.shape_cast %22 : vector<16xf32> to vector<16x1xf32>
    %24 = vector.broadcast %23 : vector<16x1xf32> to vector<16x128xf32>
    %25 = arith.subf %21, %24 : vector<16x128xf32>
    %26 = math.exp %25 : vector<16x128xf32>
    %cst_18 = arith.constant dense<0.000000e+00> : vector<16xf32>
    %27 = vector.multi_reduction <add>, %26, %cst_18 [1] : vector<16x128xf32> to vector<16xf32>
    %28 = vector.shape_cast %27 : vector<16xf32> to vector<16x1xf32>
    %29 = tpu.reciprocal %28 : vector<16x1xf32> -> vector<16x1xf32>
    %30 = vector.broadcast %29 : vector<16x1xf32> to vector<16x128xf32>
    %31 = arith.mulf %26, %30 : vector<16x128xf32>
    %c0_19 = arith.constant 0 : index
    %c0_20 = arith.constant 0 : index
    %32 = vector.load %arg8[%c0_19, %c0_20] : memref<16x128xf32, #tpu.memory_space<vmem>>, vector<16x128xf32>
    tpu.vector_store %arg8[%c0_19, %c0_20], %31 {strides = array<i32>} : memref<16x128xf32, #tpu.memory_space<vmem>>, vector<16x128xf32>,
    return
  }
  func.func @transform_0(%arg0: i32) -> (i32, i32) {
    %c0_i32 = arith.constant 0 : i32
    %c0_i32_0 = arith.constant 0 : i32
    return %arg0, %c0_i32 : i32, i32
  }
  func.func @transform_1(%arg0: i32) -> (i32, i32) {
    %c0_i32 = arith.constant 0 : i32
    %c0_i32_0 = arith.constant 0 : i32
    %c0_i32_1 = arith.constant 0 : i32
    return %c0_i32, %c0_i32_0 : i32, i32
  }
  func.func @transform_2(%arg0: i32) -> (i32, i32) {
    %c0_i32 = arith.constant 0 : i32
    %c0_i32_0 = arith.constant 0 : i32
    %c0_i32_1 = arith.constant 0 : i32
    return %c0_i32, %c0_i32_0 : i32, i32
  }
  func.func @transform_3(%arg0: i32) -> (i32, i32) {
    %c0_i32 = arith.constant 0 : i32
    %c0_i32_0 = arith.constant 0 : i32
    %c0_i32_1 = arith.constant 0 : i32
    return %c0_i32, %c0_i32_0 : i32, i32
  }
  func.func @transform_4(%arg0: i32) -> (i32, i32) {
    %c0_i32 = arith.constant 0 : i32
    %c0_i32_0 = arith.constant 0 : i32
    %c0_i32_1 = arith.constant 0 : i32
    return %c0_i32, %c0_i32_0 : i32, i32
  }
  func.func @transform_5(%arg0: i32) -> (i32, i32) {
    %c0_i32 = arith.constant 0 : i32
    %c0_i32_0 = arith.constant 0 : i32
    %c0_i32_1 = arith.constant 0 : i32
    return %c0_i32, %c0_i32_0 : i32, i32
  }
  func.func @transform_6(%arg0: i32) -> (i32, i32) {
    %c0_i32 = arith.constant 0 : i32
    %c0_i32_0 = arith.constant 0 : i32
    %c0_i32_1 = arith.constant 0 : i32
    return %c0_i32, %c0_i32_0 : i32, i32
  }
  func.func @transform_7(%arg0: i32) -> (i32, i32) {
    %c0_i32 = arith.constant 0 : i32
    %c0_i32_0 = arith.constant 0 : i32
    return %arg0, %c0_i32 : i32, i32
  }
}

</mosaic_0001>

<llo_original>
// kernel: tpu_custom_call.1
$region0: #{tpu_custom_call.1}
  #allocation0 [shape = 'u32[]', space=smem, size = 0x4, offset = 0x4, fixed_abs, tag = 'smem constant byte address 0x4 - core index']
  #allocation1 [shape = 'u32[144,128]{1,0:T(1,128)}', space=vmem, size = 0x12000, scoped, tag = 'internal scratch']
  %s0 = inlined_call_operand.vmem [shape: bf16[16,4], index: 0, kind: input, shape index: {}]
  %s1 = inlined_call_operand.vmem [shape: bf16[4,32], index: 1, kind: input, shape index: {}]
  %s2 = inlined_call_operand.vmem [shape: f32[1,32], index: 2, kind: input, shape index: {}]
  %s3 = inlined_call_operand.vmem [shape: bf16[32,16], index: 3, kind: input, shape index: {}]
  %s4 = inlined_call_operand.vmem [shape: f32[1,16], index: 4, kind: input, shape index: {}]
  %s5 = inlined_call_operand.vmem [shape: bf16[16,128], index: 5, kind: input, shape index: {}]
  %s6 = inlined_call_operand.vmem [shape: f32[1,128], index: 6, kind: input, shape index: {}]
  %s7 = inlined_call_operand.hbm [shape: f32[16,128], index: 7, kind: output, shape index: {}]
  %s8 = sld [smem:[#allocation0]]
  $region38: #{tpu_custom_call.1} parent=0
    _
  %s10 = ssub.s32 1, %s8
  %s11 = scalar_select 0, %s10, %s8
  $region1: #{tpu_custom_call.1} parent=0
    #allocation2 [shape = 'u8[8192]{0}', space=vmem, size = 0x2000, scoped, tag = 'output window, operand 0, single buffered']
    #allocation3 [shape = 's32[1]{0}', space=sflag, size = 0x4, scoped, tag = 'scoped memory for tpu_custom_call.1']
    %12 = vsyncpa [#allocation3], 0
    // Predicated region
    $region2: #{tpu_custom_call.1} parent=1 // pred_check
      _
    $region3: #{tpu_custom_call.1} parent=1 // pred_check_branch
      %14 = sbr.rel (0) target = $region5
    $region4: #{tpu_custom_call.1} parent=1 // pred_region
      _
    $region5: #{tpu_custom_call.1} parent=1 // pred_fallthru
      _
    // Predicated region
    $region6: #{tpu_custom_call.1} parent=1 // pred_check
      _
    $region7: #{tpu_custom_call.1} parent=1 // pred_check_branch
      %16 = sbr.rel (0) target = $region9
    $region8: #{tpu_custom_call.1} parent=1 // pred_region
      _
    $region9: #{tpu_custom_call.1} parent=1 // pred_fallthru
      _
    // Predicated region
    $region10: #{tpu_custom_call.1} parent=1 // pred_check
      _
    $region11: #{tpu_custom_call.1} parent=1 // pred_check_branch
      %18 = sbr.rel (0) target = $region13
    $region12: #{tpu_custom_call.1} parent=1 // pred_region
      _
    $region13: #{tpu_custom_call.1} parent=1 // pred_fallthru
      _
    // Predicated region
    $region14: #{tpu_custom_call.1} parent=1 // pred_check
      _
    $region15: #{tpu_custom_call.1} parent=1 // pred_check_branch
      %20 = sbr.rel (0) target = $region17
    $region16: #{tpu_custom_call.1} parent=1 // pred_region
      _
    $region17: #{tpu_custom_call.1} parent=1 // pred_fallthru
      _
    // Predicated region
    $region18: #{tpu_custom_call.1} parent=1 // pred_check
      _
    $region19: #{tpu_custom_call.1} parent=1 // pred_check_branch
      %22 = sbr.rel (0) target = $region21
    $region20: #{tpu_custom_call.1} parent=1 // pred_region
      _
    $region21: #{tpu_custom_call.1} parent=1 // pred_fallthru
      _
    // Predicated region
    $region22: #{tpu_custom_call.1} parent=1 // pred_check
      _
    $region23: #{tpu_custom_call.1} parent=1 // pred_check_branch
      %24 = sbr.rel (0) target = $region25
    $region24: #{tpu_custom_call.1} parent=1 // pred_region
      _
    $region25: #{tpu_custom_call.1} parent=1 // pred_fallthru
      _
    // Predicated region
    $region26: #{tpu_custom_call.1} parent=1 // pred_check
      _
    $region27: #{tpu_custom_call.1} parent=1 // pred_check_branch
      %26 = sbr.rel (0) target = $region29
    $region28: #{tpu_custom_call.1} parent=1 // pred_region
      _
    $region29: #{tpu_custom_call.1} parent=1 // pred_fallthru
      _
    %v28 = vld [vmem:[%s0] sm:$0xf]
    %v29 = vld [vmem:[%s0 + $0x4] sm:$0xf]
    %v30 = vld [vmem:[%s1] sm:$0x3]
    %v31 = vld [vmem:[%s2] sm:$0x1]
    %v33 = vlaneseq
    %v34 = vshrl.u32 %v33, 7
    %v35 = vsub.s32 0, %v34
    %v36 = vrot.slane %v31, %v35
    %v40 = vunpack.c.l.b16 %v28
    %v41 = vunpack.c.l.b16 %v29
    %v42 = vpack.c.b16 %v41, %v40
    %vm43 = vcmask 31744
    %v45 = vsel %vm43, %v42, 0
    %vm47 = vcmask 1041408
    %v49 = vsel %vm47, %v30, 0
    %51 = vmatprep.subr.bf16.mxu0 0
    %52 = vmatpush1.bf16.msra.mxu0 %v49
    %53 = vmatprep.subr.bf16.mxu0 0
    %54 = vmatpush1.bf16.msra.mxu0 0
    %55 = vmatprep.subr.bf16.mxu0 0
    %56 = vmatpush1.bf16.msra.mxu0 0
    %57 = vmatprep.subr.bf16.mxu0 0
    %58 = vmatpush1.bf16.msra.mxu0 0
    %59 = vmatprep.subr.bf16.mxu0 0
    %60 = vmatpush1.bf16.msra.mxu0 0
    %61 = vmatprep.subr.bf16.mxu0 0
    %62 = vmatpush1.bf16.msra.mxu0 0
    %63 = vmatprep.subr.bf16.mxu0 0
    %64 = vmatpush1.bf16.msra.mxu0 0
    %65 = vmatprep.subr.bf16.mxu0 0
    %66 = vmatpush1.bf16.msra.mxu0 0
    %67 = vmatprep.subr.bf16.mxu0 0
    %68 = vmatpush1.bf16.msra.mxu0 0
    %69 = vmatprep.subr.bf16.mxu0 0
    %70 = vmatpush1.bf16.msra.mxu0 0
    %71 = vmatprep.subr.bf16.mxu0 0
    %72 = vmatpush1.bf16.msra.mxu0 0
    %73 = vmatprep.subr.bf16.mxu0 0
    %74 = vmatpush1.bf16.msra.mxu0 0
    %75 = vmatprep.subr.bf16.mxu0 0
    %76 = vmatpush1.bf16.msra.mxu0 0
    %77 = vmatprep.subr.bf16.mxu0 0
    %78 = vmatpush1.bf16.msra.mxu0 0
    %79 = vmatprep.subr.bf16.mxu0 0
    %80 = vmatpush1.bf16.msra.mxu0 0
    %81 = vmatprep.subr.bf16.mxu0 0
    %82 = vmatpush1.bf16.msra.mxu0 0
    %83 = vmatprep.mubr.bf16.mxu0 0
    %84 = vmatmul.mubr.bf16.gmra.mrb[0].mxu0 %v45
    %v85 = vpop.f32.mrb[0].mxu0
    %v86 = vadd.f32 %v36, %v85
    %v87 = vpop.f32.mrb[0].mxu0
    %v88 = vpop.f32.mrb[0].mxu0
    %v89 = vadd.f32 %v36, %v88
    %v90 = vpop.f32.mrb[0].mxu0
    %91 = vdwg.mxu0
    %v92 = vmax.f32 %v86, 0.0
    %v93 = vmax.f32 %v89, 0.0
    %v94 = vpack.c.bf16 %v93, %v92
    %v95 = vld [vmem:[%s3] sm:$0xf]
    %v96 = vld [vmem:[%s3 + $0x4] sm:$0xf]
    %v97 = vld [vmem:[%s3 + $0x8] sm:$0xf]
    %v98 = vld [vmem:[%s3 + $0xc] sm:$0xf]
    %v99 = vld [vmem:[%s4] sm:$0x1]
    %v101 = vlaneseq
    %v102 = vshrl.u32 %v101, 7
    %v103 = vsub.s32 0, %v102
    %v104 = vrot.slane %v99, %v103
    %v110 = vunpack.c.l.b16 %v95
    %v111 = vunpack.c.l.b16 %v96
    %v112 = vunpack.c.l.b16 %v97
    %v113 = vunpack.c.l.b16 %v98
    %v114 = vpack.c.b16 %v111, %v110
    %v115 = vpack.c.b16 %v113, %v112
    %vm118 = vcmask 261120
    %v120 = vsel %vm118, %v94, 0
    %122 = vmatprep.subr.bf16.mxu0 0
    %123 = vmatpush1.bf16.msra.mxu0 %v114
    %124 = vmatprep.subr.bf16.mxu0 0
    %125 = vmatpush1.bf16.msra.mxu0 %v115
    %126 = vmatprep.subr.bf16.mxu0 0
    %127 = vmatpush1.bf16.msra.mxu0 0
    %128 = vmatprep.subr.bf16.mxu0 0
    %129 = vmatpush1.bf16.msra.mxu0 0
    %130 = vmatprep.subr.bf16.mxu0 0
    %131 = vmatpush1.bf16.msra.mxu0 0
    %132 = vmatprep.subr.bf16.mxu0 0
    %133 = vmatpush1.bf16.msra.mxu0 0
    %134 = vmatprep.subr.bf16.mxu0 0
    %135 = vmatpush1.bf16.msra.mxu0 0
    %136 = vmatprep.subr.bf16.mxu0 0
    %137 = vmatpush1.bf16.msra.mxu0 0
    %138 = vmatprep.subr.bf16.mxu0 0
    %139 = vmatpush1.bf16.msra.mxu0 0
    %140 = vmatprep.subr.bf16.mxu0 0
    %141 = vmatpush1.bf16.msra.mxu0 0
    %142 = vmatprep.subr.bf16.mxu0 0
    %143 = vmatpush1.bf16.msra.mxu0 0
    %144 = vmatprep.subr.bf16.mxu0 0
    %145 = vmatpush1.bf16.msra.mxu0 0
    %146 = vmatprep.subr.bf16.mxu0 0
    %147 = vmatpush1.bf16.msra.mxu0 0
    %148 = vmatprep.subr.bf16.mxu0 0
    %149 = vmatpush1.bf16.msra.mxu0 0
    %150 = vmatprep.subr.bf16.mxu0 0
    %151 = vmatpush1.bf16.msra.mxu0 0
    %152 = vmatprep.subr.bf16.mxu0 0
    %153 = vmatpush1.bf16.msra.mxu0 0
    %154 = vmatprep.mubr.bf16.mxu0 0
    %155 = vmatmul.mubr.bf16.gmra.mrb[0].mxu0 %v120
    %v156 = vpop.f32.mrb[0].mxu0
    %v157 = vadd.f32 %v104, %v156
    %v158 = vpop.f32.mrb[0].mxu0
    %v159 = vpop.f32.mrb[0].mxu0
    %v160 = vadd.f32 %v104, %v159
    %v161 = vpop.f32.mrb[0].mxu0
    %162 = vdwg.mxu0
    %v163 = vmax.f32 %v157, 0.0
    %v164 = vmax.f32 %v160, 0.0
    %v165 = vpack.c.bf16 %v164, %v163
    %v166 = vld [vmem:[%s5] sm:$0xf]
    %v167 = vld [vmem:[%s5 + $0x4] sm:$0xf]
    %v168 = vld [vmem:[%s6] sm:$0x1]
    %v170 = vlaneseq
    %v171 = vshrl.u32 %v170, 7
    %v172 = vsub.s32 0, %v171
    %v173 = vrot.slane %v168, %v172
    %v177 = vunpack.c.l.b16 %v166
    %v178 = vunpack.c.l.b16 %v167
    %v179 = vpack.c.b16 %v178, %v177
    %vm181 = vcmask 130048
    %v183 = vsel %vm181, %v165, 0
    %185 = vmatprep.subr.bf16.mxu0 0
    %186 = vmatpush1.bf16.msra.mxu0 %v179
    %187 = vmatprep.subr.bf16.mxu0 0
    %188 = vmatpush1.bf16.msra.mxu0 0
    %189 = vmatprep.subr.bf16.mxu0 0
    %190 = vmatpush1.bf16.msra.mxu0 0
    %191 = vmatprep.subr.bf16.mxu0 0
    %192 = vmatpush1.bf16.msra.mxu0 0
    %193 = vmatprep.subr.bf16.mxu0 0
    %194 = vmatpush1.bf16.msra.mxu0 0
    %195 = vmatprep.subr.bf16.mxu0 0
    %196 = vmatpush1.bf16.msra.mxu0 0
    %197 = vmatprep.subr.bf16.mxu0 0
    %198 = vmatpush1.bf16.msra.mxu0 0
    %199 = vmatprep.subr.bf16.mxu0 0
    %200 = vmatpush1.bf16.msra.mxu0 0
    %201 = vmatprep.subr.bf16.mxu0 0
    %202 = vmatpush1.bf16.msra.mxu0 0
    %203 = vmatprep.subr.bf16.mxu0 0
    %204 = vmatpush1.bf16.msra.mxu0 0
    %205 = vmatprep.subr.bf16.mxu0 0
    %206 = vmatpush1.bf16.msra.mxu0 0
    %207 = vmatprep.subr.bf16.mxu0 0
    %208 = vmatpush1.bf16.msra.mxu0 0
    %209 = vmatprep.subr.bf16.mxu0 0
    %210 = vmatpush1.bf16.msra.mxu0 0
    %211 = vmatprep.subr.bf16.mxu0 0
    %212 = vmatpush1.bf16.msra.mxu0 0
    %213 = vmatprep.subr.bf16.mxu0 0
    %214 = vmatpush1.bf16.msra.mxu0 0
    %215 = vmatprep.subr.bf16.mxu0 0
    %216 = vmatpush1.bf16.msra.mxu0 0
    %217 = vmatprep.mubr.bf16.mxu0 0
    %218 = vmatmul.mubr.bf16.gmra.mrb[0].mxu0 %v183
    %v219 = vpop.f32.mrb[0].mxu0
    %v220 = vadd.f32 %v173, %v219
    %v221 = vpop.f32.mrb[0].mxu0
    %v222 = vpop.f32.mrb[0].mxu0
    %v223 = vadd.f32 %v173, %v222
    %v224 = vpop.f32.mrb[0].mxu0
    %225 = vdwg.mxu0
    %226 = vmax.xlane.f32.xlu0 %v220
    %v227 = vpop.xlane.xlu0 %226
    %228 = vmax.xlane.f32.xlu0 %v223
    %v229 = vpop.xlane.xlu0 %228
    %v230 = vsub.f32 %v220, %v227
    %v231 = vsub.f32 %v223, %v229
    %v232 = vmul.f32 %v230, 1.442695
    %v233 = vpow.pop %v232
    %v234 = vmul.f32 %v231, 1.442695
    %v235 = vpow.pop %v234
    %236 = vadd.xlane.f32.xlu0 %v233
    %v237 = vpop.xlane.xlu0 %236
    %238 = vadd.xlane.f32.xlu0 %v235
    %v239 = vpop.xlane.xlu0 %238
    %v240 = vrcp.pop %v237
    %v241 = vrcp.pop %v239
    %v242 = vmul.f32 %v233, %v240
    %v243 = vmul.f32 %v235, %v241
    %244 = vst [vmem:[#allocation2] sm:$0xff] %v242
    %245 = vst [vmem:[#allocation2 + $0x8] sm:$0xff] %v243
    // Predicated region
    $region30: #{tpu_custom_call.1} parent=1 // pred_check
      _
    $region31: #{tpu_custom_call.1} parent=1 // pred_check_branch
      %247 = sbr.rel (0) target = $region33
    $region32: #{tpu_custom_call.1} parent=1 // pred_region
      %s249 = ssub.s32 256, 256
      %250 = vsyncadd [#allocation3], %s249
      %s251 = sshll.u32 [#allocation2], 4
      %s252 = int_to_ptr.vmem [resolvable:$true] %s251
      %257 = dma.vmem_to_hbm [thread:$0]  %s252, 256, %s7, [#allocation3], 128, 128, 8
    $region33: #{tpu_custom_call.1} parent=1 // pred_fallthru
      _
    // Predicated region
    $region34: #{tpu_custom_call.1} parent=1 // pred_check
      _
    $region35: #{tpu_custom_call.1} parent=1 // pred_check_branch
      %259 = sbr.rel (0) target = $region37
    $region36: #{tpu_custom_call.1} parent=1 // pred_region
      %260 = dma.done [#allocation3], 256
    $region37: #{tpu_custom_call.1} parent=1 // pred_fallthru
      _
    %261 = vsyncpa [#allocation3], 1

</llo_original>
